<compile_context>
chip_gen: v7x
topology: tpu7x:2x2x1
jax: 0.10.0
libtpu: 0.0.40
codegen_flags: <defaults>
</compile_context>

<pallas_src>
import functools

import jax
import jax.numpy as jnp
from jax.experimental import pallas as pl
from jax.experimental.pallas import tpu as pltpu


def _round_up(x, m):
    return ((x + m - 1) // m) * m


def _vmem_capacity_bytes():
    """Physical VMEM per core; conservative (v7x-sized) fallback."""
    try:
        return int(pltpu.get_tpu_info().vmem_capacity_bytes)
    except Exception:
        return 64 * 1024 * 1024


# --------------------------------------------------------------------------- #
#                                   Kernel                                    #
# --------------------------------------------------------------------------- #
def _fused_gcn_stack_kernel(a_smem, fts0_ref, adj_ref, wn_ref, b_ref,
                            out_ref, fts_ref, adj_vmem=None, adj_sem=None,
                            *, P, L, F, tm, adj_resident):
    """One grid step = (layer l, node-row tile i).

    a_smem   : (L,)          f32  SMEM   PReLU slopes (one per layer)
    fts0_ref : (N_pad, 2F)   bf16 VMEM   layer-0 fts = [h@W0 | shuf_h@W0] (host-built)
    adj_ref  : stream: (tm, N_pad) bf16 VMEM row tile
               resident: full (N_pad, N_pad) bf16 ref in HBM (pl.ANY)
    wn_ref   : (1, F, F)     bf16 VMEM   NEXT layer's (padded) weight W_{l+1}
    b_ref    : (1, 1, 2F)    f32  VMEM   this layer's bias (tiled to both halves)
    out_ref  : (1, tm, 2F)   f32  VMEM   per-(layer, tile) output block
    fts_ref  : (2, N_pad, 2F) bf16 VMEM scratch  ping-pong fts buffers
    adj_vmem : (N_pad, N_pad) bf16 VMEM scratch  resident adjacency (resident mode)
    adj_sem  : ()            DMA semaphore        (resident mode)
    """
    l = pl.program_id(0)          # layer index (0 .. L-1)
    i = pl.program_id(1)          # node row-tile index
    F2 = 2 * F
    row0 = pl.multiple_of(i * tm, tm)

    # ---- one-time prologue: seed fts slot 0, optionally pull adj into VMEM ----
    @pl.when(jnp.logical_and(l == 0, i == 0))
    def _prologue():
        fts_ref[0] = fts0_ref[...]
        if adj_resident:
            cp = pltpu.make_async_copy(adj_ref, adj_vmem, adj_sem)
            cp.start()
            cp.wait()

    if adj_resident:
        adj_tile = adj_vmem[pl.ds(row0, tm), :]          # slice the resident copy
    else:
        adj_tile = adj_ref[...]                          # streamed row tile

    slot_cur = jax.lax.rem(l, 2)                         # this layer's fts slot
    slot_nxt = 1 - slot_cur                              # next layer's fts slot
    alpha = a_smem[l]                                    # PReLU slope (SMEM scalar)
    w_next = wn_ref[0]                                   # (F, F) bf16, W_{l+1}

    # ---------------- encoder layers: clean + shuffled paths ------------------
    @pl.when(l < P)
    def _encoder():
        rhs = fts_ref[slot_cur]                          # (N_pad, 2F) bf16
        out = jnp.dot(adj_tile, rhs, preferred_element_type=jnp.float32)
        out = out + b_ref[0]
        out = jnp.where(out >= 0.0, out, alpha * out)    # PReLU (f32)
        out_ref[0] = out

        # Fused next-layer fts for this row tile (hidden under the adj matmul).
        ob = out.astype(jnp.bfloat16)
        new_c = jnp.dot(ob[:, 0:F], w_next,
                        preferred_element_type=jnp.float32).astype(jnp.bfloat16)
        new_s = jnp.dot(ob[:, F:F2], w_next,
                        preferred_element_type=jnp.float32).astype(jnp.bfloat16)

        @pl.when(slot_nxt == 0)
        def _():
            fts_ref[0, pl.ds(row0, tm), 0:F] = new_c
            fts_ref[0, pl.ds(row0, tm), F:F2] = new_s

        @pl.when(slot_nxt == 1)
        def _():
            fts_ref[1, pl.ds(row0, tm), 0:F] = new_c
            fts_ref[1, pl.ds(row0, tm), F:F2] = new_s

    # ---------------- decoder layers: clean path only (shuf half skipped) -----
    @pl.when(l >= P)
    def _decoder():
        rhs = fts_ref[slot_cur][:, 0:F]                  # (N_pad, F) bf16
        out = jnp.dot(adj_tile, rhs, preferred_element_type=jnp.float32)
        out = out + b_ref[0, :, 0:F]
        out = jnp.where(out >= 0.0, out, alpha * out)
        out_ref[0, :, 0:F] = out
        # Keep the never-read shuffled half of the HBM slab deterministic.
        out_ref[0, :, F:F2] = jnp.zeros((tm, F), jnp.float32)

        @pl.when(l < L - 1)
        def _next():
            new_c = jnp.dot(out.astype(jnp.bfloat16), w_next,
                            preferred_element_type=jnp.float32).astype(jnp.bfloat16)

            @pl.when(slot_nxt == 0)
            def _():
                fts_ref[0, pl.ds(row0, tm), 0:F] = new_c

            @pl.when(slot_nxt == 1)
            def _():
                fts_ref[1, pl.ds(row0, tm), 0:F] = new_c


def _adj_stream_spec(tm, N_pad, R):
    idx = lambda l, i: (i, 0)
    if R > 1:
        # Deeper buffering on the only large per-step stream hides DMA latency
        # across layer boundaries.  Fall back gracefully on older APIs.
        try:
            return pl.BlockSpec((tm, N_pad), idx, pipeline_mode=pl.Buffered(3))
        except Exception:
            pass
    return pl.BlockSpec((tm, N_pad), idx)


def _fused_stack_call(a_stack, fts0, adj_bf16, w_stack, b_stack, *,
                      P, L, N_pad, tm, F_pad, adj_resident, vmem_limit):
    F2 = 2 * F_pad
    R = N_pad // tm

    kernel = functools.partial(_fused_gcn_stack_kernel,
                               P=P, L=L, F=F_pad, tm=tm,
                               adj_resident=adj_resident)

    if adj_resident:
        adj_spec = pl.BlockSpec(memory_space=pl.ANY)     # raw HBM ref, manual DMA
    else:
        adj_spec = _adj_stream_spec(tm, N_pad, R)

    scratch = [pltpu.VMEM((2, N_pad, F2), jnp.bfloat16)]  # fts ping-pong (bf16)
    if adj_resident:
        scratch += [pltpu.VMEM((N_pad, N_pad), jnp.bfloat16),
                    pltpu.SemaphoreType.DMA(())]

    # Advisory cost estimate for the XLA scheduler.
    flops = int(P * (2 * N_pad * N_pad * F2 + 2 * N_pad * F2 * F_pad)
                + P * (2 * N_pad * N_pad * F_pad + 2 * N_pad * F_pad * F_pad))
    adj_passes = 1 if (adj_resident or R == 1) else L
    bytes_accessed = int(adj_passes * N_pad * N_pad * 2
                         + N_pad * F2 * 2                      # fts0
                         + L * F_pad * F_pad * 2               # weights
                         + L * F2 * 4                          # biases
                         + L * N_pad * F2 * 4)                 # outputs

    return pl.pallas_call(
        kernel,
        out_shape=jax.ShapeDtypeStruct((L, N_pad, F2), jnp.float32),
        grid_spec=pltpu.PrefetchScalarGridSpec(
            num_scalar_prefetch=0,
            grid=(L, R),
            in_specs=[
                # PReLU slopes: scalar path, no VMEM tile wasted.
                pl.BlockSpec(memory_space=pltpu.MemorySpace.SMEM),
                # Layer-0 fts (host-precomputed), fetched once.
                pl.BlockSpec((N_pad, F2), lambda l, i: (0, 0)),
                # Adjacency: resident (pl.ANY) or streamed row tile.
                adj_spec,
                # NEXT layer's weight (clamped at the last layer).
                pl.BlockSpec((1, F_pad, F_pad),
                             lambda l, i: (jnp.minimum(l + 1, L - 1), 0, 0)),
                # Current layer's bias.
                pl.BlockSpec((1, 1, F2), lambda l, i: (l, 0, 0)),
            ],
            out_specs=pl.BlockSpec((1, tm, F2), lambda l, i: (l, i, 0)),
            scratch_shapes=scratch,
        ),
        compiler_params=pltpu.CompilerParams(
            # Layer axis is a dependency chain; row axis carries next-layer fts
            # through per-core VMEM scratch -> both sequential.
            dimension_semantics=("arbitrary", "arbitrary"),
            vmem_limit_bytes=vmem_limit,
        ),
        cost_estimate=pl.CostEstimate(
            flops=flops, transcendentals=0, bytes_accessed=bytes_accessed),
    )(a_stack, fts0, adj_bf16, w_stack, b_stack)


# --------------------------------------------------------------------------- #
#                     Parameter construction / forward pass                   #
# --------------------------------------------------------------------------- #
def init_intra_encoder(key, input_dim, hidden_dim_list):
    """Stacked, lane-padded parameters (casts hoisted out of the forward pass)."""
    P = len(hidden_dim_list)
    en_dims = [input_dim] + list(hidden_dim_list)
    de_dims = en_dims[::-1]
    dims_pairs = [(en_dims[i], en_dims[i + 1]) for i in range(P)] + \
                 [(de_dims[i], de_dims[i + 1]) for i in range(P)]
    L = 2 * P
    F_pad = _round_up(max(max(p) for p in dims_pairs), 128)

    keys = jax.random.split(key, L)
    w_stack = jnp.zeros((L, F_pad, F_pad), jnp.float32)
    for idx, (f_in, f_out) in enumerate(dims_pairs):
        # xavier_normal_(gain=1.414) on the PyTorch (f_out, f_in) weight.
        std = 1.414 * (2.0 / (f_in + f_out)) ** 0.5
        w_t = jax.random.normal(keys[idx], (f_out, f_in), jnp.float32) * std
        w_stack = w_stack.at[idx, :f_in, :f_out].set(w_t.T)

    # Bias init = 0 (module default).  A non-zero bias must be written into
    # BOTH lane halves: [:f_out] and [F_pad:F_pad+f_out].
    b_stack = jnp.zeros((L, 1, 2 * F_pad), jnp.float32)
    a_stack = jnp.full((L,), 0.25, jnp.float32)            # PReLU default slope

    params = {
        "w_bf16": w_stack.astype(jnp.bfloat16),   # MXU operand (cast once)
        "w_f32": w_stack,                         # kept only for reference check
        "b": b_stack,
        "a": a_stack,
    }
    meta = {"P": P, "en_dims": en_dims, "de_dims": de_dims, "F_pad": F_pad}
    return params, meta


def intra_encoder_forward(params, meta, h, shuf_h, mps, *,
                          tm_max=None, force_stream=False):
    adj = mps[0]
    P, en_dims, de_dims, F_pad = meta["P"], meta["en_dims"], meta["de_dims"], meta["F_pad"]
    L = 2 * P
    F2 = 2 * F_pad
    N = h.shape[0]
    assert P >= 1

    # Generation-aware knobs (review: re-derive per part instead of fixed 48 MiB).
    cap = _vmem_capacity_bytes()
    vmem_limit = min(int(cap * 3 // 4), 112 * 1024 * 1024)
    if tm_max is None:
        tm_max = 512 if cap >= (96 << 20) else 256         # 128 MiB parts vs v7x

    # Node-row tiling; bf16 tiles want multiples of 16 rows (2 rows / sublane).
    if N <= tm_max:
        tm = _round_up(max(N, 16), 16)
        N_pad = tm
    else:
        tm = tm_max
        N_pad = _round_up(N, tm)
    R = N_pad // tm

    # Adjacency residency decision: avoid re-streaming adj L times when it fits.
    adj_bytes = N_pad * N_pad * 2
    working = (4 * N_pad * F2 * 2          # fts ping-pong + fts0 double buffers
               + 2 * tm * F2 * 4           # output double buffers
               + (4 << 20))                # weights/bias/Mosaic scratch headroom
    adj_resident = (not force_stream) and (R > 1) and (adj_bytes + working <= vmem_limit)

    # Pad + cast ONCE (zero padding keeps the math exact for the real rows/cols).
    adj_bf16 = (
        jnp.zeros((N_pad, N_pad), jnp.float32)
        .at[:N, :N].set(adj.astype(jnp.float32))
        .astype(jnp.bfloat16)
    )
    h0 = jnp.zeros((N_pad, F2), jnp.bfloat16)
    h0 = h0.at[:N, :en_dims[0]].set(h.astype(jnp.bfloat16))
    h0 = h0.at[:N, F_pad:F_pad + en_dims[0]].set(shuf_h.astype(jnp.bfloat16))

    # Layer-0 x@W hoisted to XLA: removes the serialized full-matrix prologue and
    # the resident f32 h0 / activation buffers from the kernel.
    w0 = params["w_bf16"][0]
    fts0 = jnp.concatenate(
        [jnp.dot(h0[:, :F_pad], w0, preferred_element_type=jnp.float32),
         jnp.dot(h0[:, F_pad:], w0, preferred_element_type=jnp.float32)],
        axis=1).astype(jnp.bfloat16)

    out_all = _fused_stack_call(
        params["a"], fts0, adj_bf16, params["w_bf16"], params["b"],
        P=P, L=L, N_pad=N_pad, tm=tm, F_pad=F_pad,
        adj_resident=adj_resident, vmem_limit=vmem_limit)

    # Slice padded per-layer slabs back to the module's shapes.
    # NOTE: rows N..N_pad of out_all carry padding garbage (never read here).
    en_emb_list, en_shuf_emb_list, de_recon_list = [], [], []
    for i in range(P):
        f_out = en_dims[i + 1]
        en_emb_list.append(out_all[i, :N, :f_out])
        en_shuf_emb_list.append(out_all[i, :N, F_pad:F_pad + f_out])
    for j in range(P):
        f_out = de_dims[j + 1]
        de_recon_list.append(out_all[P + j, :N, :f_out])

    return (en_emb_list[-1], en_emb_list,
            en_shuf_emb_list[-1], en_shuf_emb_list,
            de_recon_list[-1], de_recon_list)


# --------------------------------------------------------------------------- #
#                 Pure-JAX float32 reference (mirrors the module)             #
# --------------------------------------------------------------------------- #
def reference_forward(params, meta, h, shuf_h, adj):
    P, en_dims, de_dims = meta["P"], meta["en_dims"], meta["de_dims"]

    def gcn(x, idx, f_in, f_out):
        w = params["w_f32"][idx, :f_in, :f_out]
        b = params["b"][idx, 0, :f_out]
        a = params["a"][idx]
        out = adj @ (x @ w) + b
        return jnp.where(out >= 0, out, a * out)

    en_list, shuf_list, de_list = [], [], []
    x, xs = h, shuf_h
    for i in range(P):
        x = gcn(x, i, en_dims[i], en_dims[i + 1])
        xs = gcn(xs, i, en_dims[i], en_dims[i + 1])
        en_list.append(x)
        shuf_list.append(xs)
    d = x
    for j in range(P):
        d = gcn(d, P + j, de_dims[j], de_dims[j + 1])
        de_list.append(d)
    return (x, en_list, xs, shuf_list, d, de_list)


# --------------------------------------------------------------------------- #
#                                    Demo                                     #
# --------------------------------------------------------------------------- #
def _run_case(key, N, input_dim, hidden_dim_list, tm_max=None, force_stream=False):
    k_param, k_h, k_perm, k_adj = jax.random.split(key, 4)
    params, meta = init_intra_encoder(k_param, input_dim, hidden_dim_list)

    h = jax.random.normal(k_h, (N, input_dim), jnp.float32)
    perm = jax.random.permutation(k_perm, N)
    shuf_h = h[perm]                       # corrupted / shuffled node features

    # Row-normalized dense adjacency with self-loops (stands in for sparse mps[0]).
    a_raw = (jax.random.uniform(k_adj, (N, N)) > 0.6).astype(jnp.float32)
    a_raw = a_raw + jnp.eye(N, dtype=jnp.float32)
    adj = a_raw / jnp.sum(a_raw, axis=1, keepdims=True)

    outs = intra_encoder_forward(params, meta, h, shuf_h, [adj],
                                 tm_max=tm_max, force_stream=force_stream)
    jax.block_until_ready(outs)

    en_embed, en_emb_list, en_shuf_embed, en_shuf_emb_list, de_recon, de_recon_list = outs
    P = len(hidden_dim_list)
    assert en_embed.shape == (N, hidden_dim_list[-1])
    assert en_shuf_embed.shape == (N, hidden_dim_list[-1])
    assert de_recon.shape == (N, input_dim)
    assert len(en_emb_list) == P and len(en_shuf_emb_list) == P and len(de_recon_list) == P

    # Numerical check vs the f32 pure-JAX reference (bf16 MXU inputs, f32 accum).
    ref = reference_forward(params, meta, h, shuf_h, adj)
    for r, k_out in zip(jax.tree_util.tree_leaves(ref), jax.tree_util.tree_leaves(outs)):
        assert r.shape == k_out.shape
        assert jnp.allclose(r, k_out, rtol=5e-2, atol=5e-2), \
            f"max abs err {float(jnp.max(jnp.abs(r - k_out)))}"


if __name__ == "__main__":
    root = jax.random.PRNGKey(0)
    k1, k2, k3 = jax.random.split(root, 3)

    # 1) Tiny single-tile problem (R == 1, streamed adj fetched exactly once).
    _run_case(k1, N=8, input_dim=16, hidden_dim_list=[32, 16])

    # 2) Multi-tile problem (R > 1): adjacency resident in VMEM, sliced in-kernel.
    _run_case(k2, N=300, input_dim=24, hidden_dim_list=[48, 96, 32], tm_max=128)

    # 3) Multi-tile streaming path (adj re-streamed per layer, deeper buffering).
    _run_case(k3, N=200, input_dim=16, hidden_dim_list=[32, 16], tm_max=64,
              force_stream=True)

    print("KERNEL_OK")
</pallas_src>

<mosaic_0001>
module attributes {stable_mosaic.version = 11 : i64} {
  func.func @_fused_gcn_stack_kernel(%arg0: i32, %arg1: i32, %arg2: memref<4xf32, #tpu.memory_space<smem>>, %arg3: memref<16x256xbf16, #tpu.memory_space<vmem>>, %arg4: memref<16x16xbf16, #tpu.memory_space<vmem>>, %arg5: memref<1x128x128xbf16, #tpu.memory_space<vmem>>, %arg6: memref<1x1x256xf32, #tpu.memory_space<vmem>>, %arg7: memref<1x16x256xf32, #tpu.memory_space<vmem>>, %arg8: memref<2x16x256xbf16, #tpu.memory_space<vmem>>) attributes {dimension_semantics = [#tpu.dimension_semantics<arbitrary>, #tpu.dimension_semantics<arbitrary>], iteration_bounds = array<i64: 4, 1>, scalar_prefetch = 0 : i64, scratch_operands = 1 : i64, tpu.core_type = #tpu.core_type<tc>, window_params = [{transform_indices = @transform_0, window_bounds = array<i64: 4>}, {pipeline_mode = #tpu.pipeline_mode<synchronous>, transform_indices = @transform_1, window_bounds = array<i64: 16, 256>}, {transform_indices = @transform_2, window_bounds = array<i64: 16, 16>}, {transform_indices = @transform_3, window_bounds = array<i64: 1, 128, 128>}, {transform_indices = @transform_4, window_bounds = array<i64: 1, 1, 256>}, {transform_indices = @transform_5, window_bounds = array<i64: 1, 16, 256>}]} {
    %c16_i32 = arith.constant 16 : i32
    %0 = arith.muli %arg1, %c16_i32 : i32
    %1 = tpu.assume_multiple %0, 16 : i32
    %c0_i32 = arith.constant 0 : i32
    %2 = arith.cmpi eq, %arg0, %c0_i32 : i32
    %c0_i32_0 = arith.constant 0 : i32
    %3 = arith.cmpi eq, %arg1, %c0_i32_0 : i32
    %4 = arith.andi %2, %3 : i1
    %5 = arith.extui %4 : i1 to i32
    %c0_i32_1 = arith.constant 0 : i32
    %6 = arith.cmpi ne, %5, %c0_i32_1 : i32
    scf.if %6 {
      %c0_10 = arith.constant 0 : index
      %c0_11 = arith.constant 0 : index
      %20 = vector.load %arg3[%c0_10, %c0_11] : memref<16x256xbf16, #tpu.memory_space<vmem>>, vector<16x256xbf16>
      %c0_12 = arith.constant 0 : index
      %c0_13 = arith.constant 0 : index
      %c0_14 = arith.constant 0 : index
      %21 = vector.load %arg8[%c0_12, %c0_13, %c0_14] : memref<2x16x256xbf16, #tpu.memory_space<vmem>>, vector<1x16x256xbf16>
      %22 = vector.shape_cast %21 : vector<1x16x256xbf16> to vector<16x256xbf16>
      %23 = vector.shape_cast %20 : vector<16x256xbf16> to vector<1x16x256xbf16>
      tpu.vector_store %arg8[%c0_12, %c0_13, %c0_14], %23 {strides = array<i32>} : memref<2x16x256xbf16, #tpu.memory_space<vmem>>, vector<1x16x256xbf16>,
    } else {
    }
    %c0 = arith.constant 0 : index
    %c0_2 = arith.constant 0 : index
    %7 = vector.load %arg4[%c0, %c0_2] : memref<16x16xbf16, #tpu.memory_space<vmem>>, vector<16x16xbf16>
    %c2_i32 = arith.constant 2 : i32
    %8 = arith.remsi %arg0, %c2_i32 : i32
    %c1_i32 = arith.constant 1 : i32
    %9 = arith.subi %c1_i32, %8 : i32
    %10 = arith.index_cast %arg0 : i32 to index
    %11 = memref.load %arg2[%10] : memref<4xf32, #tpu.memory_space<smem>>
    %c0_3 = arith.constant 0 : index
    %c0_4 = arith.constant 0 : index
    %c0_5 = arith.constant 0 : index
    %12 = vector.load %arg5[%c0_3, %c0_4, %c0_5] : memref<1x128x128xbf16, #tpu.memory_space<vmem>>, vector<1x128x128xbf16>
    %13 = vector.shape_cast %12 : vector<1x128x128xbf16> to vector<128x128xbf16>
    %c2_i32_6 = arith.constant 2 : i32
    %14 = arith.cmpi slt, %arg0, %c2_i32_6 : i32
    %15 = arith.extui %14 : i1 to i32
    %c0_i32_7 = arith.constant 0 : i32
    %16 = arith.cmpi ne, %15, %c0_i32_7 : i32
    scf.if %16 {
      %20 = arith.index_cast %8 : i32 to index
      %c0_10 = arith.constant 0 : index
      %c0_11 = arith.constant 0 : index
      %21 = vector.load %arg8[%20, %c0_10, %c0_11] : memref<2x16x256xbf16, #tpu.memory_space<vmem>>, vector<1x16x256xbf16>
      %22 = vector.shape_cast %21 : vector<1x16x256xbf16> to vector<16x256xbf16>
      %cst = arith.constant dense<0.000000e+00> : vector<16x256xf32>
      %23 = tpu.matmul %7, %22, %cst {dimension_numbers = #tpu.dot_dimension_numbers<[1], [0], [0], [1], [0, 0, 1, 1], [], []>} : vector<16x16xbf16>, vector<16x256xbf16>, vector<16x256xf32> -> vector<16x256xf32>
      %c0_12 = arith.constant 0 : index
      %c0_13 = arith.constant 0 : index
      %c0_14 = arith.constant 0 : index
      %24 = vector.load %arg6[%c0_12, %c0_13, %c0_14] : memref<1x1x256xf32, #tpu.memory_space<vmem>>, vector<1x1x256xf32>
      %25 = vector.shape_cast %24 : vector<1x1x256xf32> to vector<1x256xf32>
      %26 = vector.broadcast %25 : vector<1x256xf32> to vector<16x256xf32>
      %27 = arith.addf %23, %26 : vector<16x256xf32>
      %cst_15 = arith.constant 0.000000e+00 : f32
      %28 = vector.broadcast %cst_15 : f32 to vector<16x256xf32>
      %29 = arith.cmpf oge, %27, %28 : vector<16x256xf32>
      %30 = vector.broadcast %11 : f32 to vector<16x256xf32>
      %31 = arith.mulf %30, %27 : vector<16x256xf32>
      %32 = arith.select %29, %27, %31 : vector<16x256xi1>, vector<16x256xf32>
      %c0_16 = arith.constant 0 : index
      %c0_17 = arith.constant 0 : index
      %c0_18 = arith.constant 0 : index
      %33 = vector.load %arg7[%c0_16, %c0_17, %c0_18] : memref<1x16x256xf32, #tpu.memory_space<vmem>>, vector<1x16x256xf32>
      %34 = vector.shape_cast %33 : vector<1x16x256xf32> to vector<16x256xf32>
      %35 = vector.shape_cast %32 : vector<16x256xf32> to vector<1x16x256xf32>
      tpu.vector_store %arg7[%c0_16, %c0_17, %c0_18], %35 {strides = array<i32>} : memref<1x16x256xf32, #tpu.memory_space<vmem>>, vector<1x16x256xf32>,
      %36 = arith.truncf %32 : vector<16x256xf32> to vector<16x256xbf16>
      %37 = vector.extract_strided_slice %36 {offsets = [0, 0], sizes = [16, 128], strides = [1, 1]} : vector<16x256xbf16> to vector<16x128xbf16>
      %cst_19 = arith.constant dense<0.000000e+00> : vector<16x128xf32>
      %38 = tpu.matmul %37, %13, %cst_19 {dimension_numbers = #tpu.dot_dimension_numbers<[1], [0], [0], [1], [0, 0, 1, 1], [], []>} : vector<16x128xbf16>, vector<128x128xbf16>, vector<16x128xf32> -> vector<16x128xf32>
      %39 = arith.truncf %38 : vector<16x128xf32> to vector<16x128xbf16>
      %40 = vector.extract_strided_slice %36 {offsets = [0, 128], sizes = [16, 128], strides = [1, 1]} : vector<16x256xbf16> to vector<16x128xbf16>
      %cst_20 = arith.constant dense<0.000000e+00> : vector<16x128xf32>
      %41 = tpu.matmul %40, %13, %cst_20 {dimension_numbers = #tpu.dot_dimension_numbers<[1], [0], [0], [1], [0, 0, 1, 1], [], []>} : vector<16x128xbf16>, vector<128x128xbf16>, vector<16x128xf32> -> vector<16x128xf32>
      %42 = arith.truncf %41 : vector<16x128xf32> to vector<16x128xbf16>
      %c0_i32_21 = arith.constant 0 : i32
      %43 = arith.cmpi eq, %9, %c0_i32_21 : i32
      %44 = arith.extui %43 : i1 to i32
      %c0_i32_22 = arith.constant 0 : i32
      %45 = arith.cmpi ne, %44, %c0_i32_22 : i32
      scf.if %45 {
        %c0_25 = arith.constant 0 : index
        %49 = arith.index_cast %1 : i32 to index
        %c0_26 = arith.constant 0 : index
        %50 = vector.load %arg8[%c0_25, %49, %c0_26] : memref<2x16x256xbf16, #tpu.memory_space<vmem>>, vector<1x16x128xbf16>
        %51 = vector.shape_cast %50 : vector<1x16x128xbf16> to vector<16x128xbf16>
        %52 = vector.shape_cast %39 : vector<16x128xbf16> to vector<1x16x128xbf16>
        tpu.vector_store %arg8[%c0_25, %49, %c0_26], %52 {strides = array<i32>} : memref<2x16x256xbf16, #tpu.memory_space<vmem>>, vector<1x16x128xbf16>,
        %c0_27 = arith.constant 0 : index
        %53 = arith.index_cast %1 : i32 to index
        %c128 = arith.constant 128 : index
        %54 = vector.load %arg8[%c0_27, %53, %c128] : memref<2x16x256xbf16, #tpu.memory_space<vmem>>, vector<1x16x128xbf16>
        %55 = vector.shape_cast %54 : vector<1x16x128xbf16> to vector<16x128xbf16>
        %56 = vector.shape_cast %42 : vector<16x128xbf16> to vector<1x16x128xbf16>
        tpu.vector_store %arg8[%c0_27, %53, %c128], %56 {strides = array<i32>} : memref<2x16x256xbf16, #tpu.memory_space<vmem>>, vector<1x16x128xbf16>,
      } else {
      }
      %c1_i32_23 = arith.constant 1 : i32
      %46 = arith.cmpi eq, %9, %c1_i32_23 : i32
      %47 = arith.extui %46 : i1 to i32
      %c0_i32_24 = arith.constant 0 : i32
      %48 = arith.cmpi ne, %47, %c0_i32_24 : i32
      scf.if %48 {
        %c1 = arith.constant 1 : index
        %49 = arith.index_cast %1 : i32 to index
        %c0_25 = arith.constant 0 : index
        %50 = vector.load %arg8[%c1, %49, %c0_25] : memref<2x16x256xbf16, #tpu.memory_space<vmem>>, vector<1x16x128xbf16>
        %51 = vector.shape_cast %50 : vector<1x16x128xbf16> to vector<16x128xbf16>
        %52 = vector.shape_cast %39 : vector<16x128xbf16> to vector<1x16x128xbf16>
        tpu.vector_store %arg8[%c1, %49, %c0_25], %52 {strides = array<i32>} : memref<2x16x256xbf16, #tpu.memory_space<vmem>>, vector<1x16x128xbf16>,
        %c1_26 = arith.constant 1 : index
        %53 = arith.index_cast %1 : i32 to index
        %c128 = arith.constant 128 : index
        %54 = vector.load %arg8[%c1_26, %53, %c128] : memref<2x16x256xbf16, #tpu.memory_space<vmem>>, vector<1x16x128xbf16>
        %55 = vector.shape_cast %54 : vector<1x16x128xbf16> to vector<16x128xbf16>
        %56 = vector.shape_cast %42 : vector<16x128xbf16> to vector<1x16x128xbf16>
        tpu.vector_store %arg8[%c1_26, %53, %c128], %56 {strides = array<i32>} : memref<2x16x256xbf16, #tpu.memory_space<vmem>>, vector<1x16x128xbf16>,
      } else {
      }
    } else {
    }
    %c2_i32_8 = arith.constant 2 : i32
    %17 = arith.cmpi sge, %arg0, %c2_i32_8 : i32
    %18 = arith.extui %17 : i1 to i32
    %c0_i32_9 = arith.constant 0 : i32
    %19 = arith.cmpi ne, %18, %c0_i32_9 : i32
    scf.if %19 {
      %20 = arith.index_cast %8 : i32 to index
      %c0_10 = arith.constant 0 : index
      %c0_11 = arith.constant 0 : index
      %21 = vector.load %arg8[%20, %c0_10, %c0_11] : memref<2x16x256xbf16, #tpu.memory_space<vmem>>, vector<1x16x256xbf16>
      %22 = vector.shape_cast %21 : vector<1x16x256xbf16> to vector<16x256xbf16>
      %23 = vector.extract_strided_slice %22 {offsets = [0, 0], sizes = [16, 128], strides = [1, 1]} : vector<16x256xbf16> to vector<16x128xbf16>
      %cst = arith.constant dense<0.000000e+00> : vector<16x128xf32>
      %24 = tpu.matmul %7, %23, %cst {dimension_numbers = #tpu.dot_dimension_numbers<[1], [0], [0], [1], [0, 0, 1, 1], [], []>} : vector<16x16xbf16>, vector<16x128xbf16>, vector<16x128xf32> -> vector<16x128xf32>
      %c0_12 = arith.constant 0 : index
      %c0_13 = arith.constant 0 : index
      %c0_14 = arith.constant 0 : index
      %25 = vector.load %arg6[%c0_12, %c0_13, %c0_14] : memref<1x1x256xf32, #tpu.memory_space<vmem>>, vector<1x1x128xf32>
      %26 = vector.shape_cast %25 : vector<1x1x128xf32> to vector<1x128xf32>
      %27 = vector.broadcast %26 : vector<1x128xf32> to vector<16x128xf32>
      %28 = arith.addf %24, %27 : vector<16x128xf32>
      %cst_15 = arith.constant 0.000000e+00 : f32
      %29 = vector.broadcast %cst_15 : f32 to vector<16x128xf32>
      %30 = arith.cmpf oge, %28, %29 : vector<16x128xf32>
      %31 = vector.broadcast %11 : f32 to vector<16x128xf32>
      %32 = arith.mulf %31, %28 : vector<16x128xf32>
      %33 = arith.select %30, %28, %32 : vector<16x128xi1>, vector<16x128xf32>
      %c0_16 = arith.constant 0 : index
      %c0_17 = arith.constant 0 : index
      %c0_18 = arith.constant 0 : index
      %34 = vector.load %arg7[%c0_16, %c0_17, %c0_18] : memref<1x16x256xf32, #tpu.memory_space<vmem>>, vector<1x16x128xf32>
      %35 = vector.shape_cast %34 : vector<1x16x128xf32> to vector<16x128xf32>
      %36 = vector.shape_cast %33 : vector<16x128xf32> to vector<1x16x128xf32>
      tpu.vector_store %arg7[%c0_16, %c0_17, %c0_18], %36 {strides = array<i32>} : memref<1x16x256xf32, #tpu.memory_space<vmem>>, vector<1x16x128xf32>,
      %cst_19 = arith.constant 0.000000e+00 : f32
      %37 = vector.broadcast %cst_19 : f32 to vector<16x128xf32>
      %c0_20 = arith.constant 0 : index
      %c0_21 = arith.constant 0 : index
      %c128 = arith.constant 128 : index
      %38 = vector.load %arg7[%c0_20, %c0_21, %c128] : memref<1x16x256xf32, #tpu.memory_space<vmem>>, vector<1x16x128xf32>
      %39 = vector.shape_cast %38 : vector<1x16x128xf32> to vector<16x128xf32>
      %40 = vector.shape_cast %37 : vector<16x128xf32> to vector<1x16x128xf32>
      tpu.vector_store %arg7[%c0_20, %c0_21, %c128], %40 {strides = array<i32>} : memref<1x16x256xf32, #tpu.memory_space<vmem>>, vector<1x16x128xf32>,
      %c3_i32 = arith.constant 3 : i32
      %41 = arith.cmpi slt, %arg0, %c3_i32 : i32
      %42 = arith.extui %41 : i1 to i32
      %c0_i32_22 = arith.constant 0 : i32
      %43 = arith.cmpi ne, %42, %c0_i32_22 : i32
      scf.if %43 {
        %44 = arith.truncf %33 : vector<16x128xf32> to vector<16x128xbf16>
        %cst_23 = arith.constant dense<0.000000e+00> : vector<16x128xf32>
        %45 = tpu.matmul %44, %13, %cst_23 {dimension_numbers = #tpu.dot_dimension_numbers<[1], [0], [0], [1], [0, 0, 1, 1], [], []>} : vector<16x128xbf16>, vector<128x128xbf16>, vector<16x128xf32> -> vector<16x128xf32>
        %46 = arith.truncf %45 : vector<16x128xf32> to vector<16x128xbf16>
        %c0_i32_24 = arith.constant 0 : i32
        %47 = arith.cmpi eq, %9, %c0_i32_24 : i32
        %48 = arith.extui %47 : i1 to i32
        %c0_i32_25 = arith.constant 0 : i32
        %49 = arith.cmpi ne, %48, %c0_i32_25 : i32
        scf.if %49 {
          %c0_28 = arith.constant 0 : index
          %53 = arith.index_cast %1 : i32 to index
          %c0_29 = arith.constant 0 : index
          %54 = vector.load %arg8[%c0_28, %53, %c0_29] : memref<2x16x256xbf16, #tpu.memory_space<vmem>>, vector<1x16x128xbf16>
          %55 = vector.shape_cast %54 : vector<1x16x128xbf16> to vector<16x128xbf16>
          %56 = vector.shape_cast %46 : vector<16x128xbf16> to vector<1x16x128xbf16>
          tpu.vector_store %arg8[%c0_28, %53, %c0_29], %56 {strides = array<i32>} : memref<2x16x256xbf16, #tpu.memory_space<vmem>>, vector<1x16x128xbf16>,
        } else {
        }
        %c1_i32_26 = arith.constant 1 : i32
        %50 = arith.cmpi eq, %9, %c1_i32_26 : i32
        %51 = arith.extui %50 : i1 to i32
        %c0_i32_27 = arith.constant 0 : i32
        %52 = arith.cmpi ne, %51, %c0_i32_27 : i32
        scf.if %52 {
          %c1 = arith.constant 1 : index
          %53 = arith.index_cast %1 : i32 to index
          %c0_28 = arith.constant 0 : index
          %54 = vector.load %arg8[%c1, %53, %c0_28] : memref<2x16x256xbf16, #tpu.memory_space<vmem>>, vector<1x16x128xbf16>
          %55 = vector.shape_cast %54 : vector<1x16x128xbf16> to vector<16x128xbf16>
          %56 = vector.shape_cast %46 : vector<16x128xbf16> to vector<1x16x128xbf16>
          tpu.vector_store %arg8[%c1, %53, %c0_28], %56 {strides = array<i32>} : memref<2x16x256xbf16, #tpu.memory_space<vmem>>, vector<1x16x128xbf16>,
        } else {
        }
      } else {
      }
    } else {
    }
    return
  }
  func.func @transform_0(%arg0: i32, %arg1: i32) -> i32 {
    %c0_i32 = arith.constant 0 : i32
    %c0_i32_0 = arith.constant 0 : i32
    return %c0_i32 : i32
  }
  func.func @transform_1(%arg0: i32, %arg1: i32) -> (i32, i32) {
    %c0_i32 = arith.constant 0 : i32
    %c0_i32_0 = arith.constant 0 : i32
    %c0_i32_1 = arith.constant 0 : i32
    return %c0_i32, %c0_i32_0 : i32, i32
  }
  func.func @transform_2(%arg0: i32, %arg1: i32) -> (i32, i32) {
    %c0_i32 = arith.constant 0 : i32
    %c0_i32_0 = arith.constant 0 : i32
    return %arg1, %c0_i32 : i32, i32
  }
  func.func @transform_3(%arg0: i32, %arg1: i32) -> (i32, i32, i32) {
    %c1_i32 = arith.constant 1 : i32
    %0 = arith.addi %arg0, %c1_i32 : i32
    %c3_i32 = arith.constant 3 : i32
    %1 = arith.minsi %0, %c3_i32 : i32
    %c0_i32 = arith.constant 0 : i32
    %c0_i32_0 = arith.constant 0 : i32
    %c0_i32_1 = arith.constant 0 : i32
    return %1, %c0_i32, %c0_i32_0 : i32, i32, i32
  }
  func.func @transform_4(%arg0: i32, %arg1: i32) -> (i32, i32, i32) {
    %c0_i32 = arith.constant 0 : i32
    %c0_i32_0 = arith.constant 0 : i32
    %c0_i32_1 = arith.constant 0 : i32
    return %arg0, %c0_i32, %c0_i32_0 : i32, i32, i32
  }
  func.func @transform_5(%arg0: i32, %arg1: i32) -> (i32, i32, i32) {
    %c0_i32 = arith.constant 0 : i32
    %c0_i32_0 = arith.constant 0 : i32
    return %arg0, %arg1, %c0_i32 : i32, i32, i32
  }
}

</mosaic_0001>

<llo_original>
// kernel: tpu_custom_call.1
$region0: #{tpu_custom_call.1}
  #allocation0 [shape = 'u32[]', space=smem, size = 0x4, offset = 0x4, fixed_abs, tag = 'smem constant byte address 0x4 - core index']
  #allocation1 [shape = 'u32[144,128]{1,0:T(1,128)}', space=vmem, size = 0x12000, scoped, tag = 'internal scratch']
  #allocation2 [shape = 'bf16[2,16,256]{2,1,0:T(16,128)(2,1)}', space=vmem, size = 0x4000, scoped, tag = 'scratch operand']
  %s0 = inlined_call_operand.hbm [shape: f32[4], index: 0, kind: input, shape index: {}]
  %s1 = inlined_call_operand.hbm [shape: bf16[16,256], index: 1, kind: input, shape index: {}]
  %s2 = inlined_call_operand.hbm [shape: bf16[16,16], index: 2, kind: input, shape index: {}]
  %s3 = inlined_call_operand.hbm [shape: bf16[4,128,128], index: 3, kind: input, shape index: {}]
  %s4 = inlined_call_operand.vmem [shape: f32[4,1,256], index: 4, kind: input, shape index: {}]
  %s5 = inlined_call_operand.hbm [shape: f32[4,16,256], index: 5, kind: output, shape index: {}]
  %s6 = sld [smem:[#allocation0]]
  $region101: #{tpu_custom_call.1} parent=0
    _
  %s8 = ssub.s32 1, %s6
  %s9 = scalar_select 0, %s8, %s6
  $region1: #{tpu_custom_call.1} parent=0
    #allocation3 [shape = 'u8[512]{0}', space=smem, size = 0x200, scoped, tag = 'input window, operand 0, single buffered']
    #allocation4 [shape = 's32[2]{0}', space=sflag, size = 0x8, scoped, tag = 'scoped memory for tpu_custom_call.1']
    #allocation5 [shape = 's32[2]{0}', space=sflag, size = 0x8, scoped, tag = 'scoped memory for tpu_custom_call.1']
    #allocation6 [shape = 's32[2]{0}', space=sflag, size = 0x8, scoped, tag = 'scoped memory for tpu_custom_call.1']
    #allocation7 [shape = 'u8[8192]{0}', space=vmem, size = 0x2000, scoped, tag = 'input window, operand 1, single buffered']
    #allocation8 [shape = 'u8[4096]{0}', space=vmem, size = 0x1000, scoped, tag = 'input window, operand 2, single buffered']
    #allocation9 [shape = 's32[1]{0}', space=sflag, size = 0x4, scoped, tag = 'scoped memory for tpu_custom_call.1']
    #allocation10 [shape = 'u8[65536]{0}', space=vmem, size = 0x10000, scoped, tag = 'input window, operand 3']
    #allocation11 [shape = 'u8[32768]{0}', space=vmem, size = 0x8000, scoped, tag = 'output window, operand 0']
    %10 = vsyncpa [#allocation6], 0
    %11 = vsyncpa [#allocation4], 0
    %12 = vsyncpa [#allocation9], 0
    %13 = vsyncpa [#allocation5], 0
    %s14 = scalar_lea.sflag [#allocation5], 1
    %15 = vsyncpa %s14, 0
    loop: start=0, step=1, limit=6
    $region2: #{tpu_custom_call.1} parent=1 // loop_pre_header
      _
    $region3: #{tpu_custom_call.1} parent=1 // loop_header
      %s17 = sphi 0, %s21
      %p18 = scmp.ge.s32.totalorder %s17, 6
      %s24 = sphi 0, %s36
      %s25 = sphi 0, %s32
      %s26 = sphi 0, %s24
      %s27 = sphi 0, %s25
      %s28 = sphi 0, %s26
      %s29 = sphi 0, %s27
      %s37 = sphi 0, %s37
      %s39 = sphi 0, %s37
      %s40 = sphi 0, %s39
      %s54 = sphi 0, %s40
      %s58 = sphi 0, %s58
      %s60 = sphi 0, %s58
      %s61 = sphi 0, %s60
      %s75 = sphi 0, %s61
      %s81 = sphi 0, %s83
      %s84 = sphi 0, %s81
      %s85 = sphi 0, %s84
      %s101 = sphi 0, %s85
      %s113 = sphi 0, %s115
      %s116 = sphi 0, %s113
      %s117 = sphi 0, %s116
      %s133 = sphi 0, %s117
      %s139 = sphi 0, %s141
      %s142 = sphi 0, %s139
      %s143 = sphi 0, %s142
      %s159 = sphi 0, %s143
      %s167 = sphi 0, %s169
      %s170 = sphi 0, %s167
      %s171 = sphi 0, %s170
      %s187 = sphi 0, %s171
    $region4: #{tpu_custom_call.1} parent=1 // loop_header_branch
      %20 = sbr.rel (%p18) target = $region8
    $region5: #{tpu_custom_call.1} parent=1 // loop_body
      %s22 = ssub.s32 %s17, 1
      %s23 = ssub.s32 %s17, 2
      %s30 = sadd.s32 1, %s25
      %p31 = scmp.ge.s32.totalorder %s30, 1
      %s32 = scalar_select %p31, 0, %s30
      %s33 = sadd.s32 1, %s24
      %s34 = scalar_select %p31, %s33, %s24
      %p35 = scmp.ge.s32.totalorder %s34, 4
      %s36 = scalar_select %p35, 0, %s34
      %s38 = sadd.s32 %s37, 1
      %p41 = scmp.eq.s32.totalorder %s17, 3
      %p42 = scmp.ne.s32.totalorder %s37, %s39
      %p43 = scmp.eq.s32.totalorder %s17, 0
      %p44 = por %p42, %p43
      %p45 = scmp.ne.s32.totalorder %s37, %s39
      %p46 = scmp.eq.s32.totalorder %s22, 3
      %p47 = por %p45, %p46
      %p48 = scmp.ne.s32.totalorder %s39, %s40
      %p49 = scmp.eq.s32.totalorder %s22, 0
      %p50 = por %p48, %p49
      %p51 = scmp.ne.s32.totalorder %s39, %s40
      %p52 = scmp.eq.s32.totalorder %s23, 3
      %p53 = por %p51, %p52
      %p55 = scmp.ne.s32.totalorder %s40, %s54
      %p56 = scmp.eq.s32.totalorder %s23, 0
      %p57 = por %p55, %p56
      %s59 = sadd.s32 %s58, 1
      %p62 = scmp.eq.s32.totalorder %s17, 3
      %p63 = scmp.ne.s32.totalorder %s58, %s60
      %p64 = scmp.eq.s32.totalorder %s17, 0
      %p65 = por %p63, %p64
      %p66 = scmp.ne.s32.totalorder %s58, %s60
      %p67 = scmp.eq.s32.totalorder %s22, 3
      %p68 = por %p66, %p67
      %p69 = scmp.ne.s32.totalorder %s60, %s61
      %p70 = scmp.eq.s32.totalorder %s22, 0
      %p71 = por %p69, %p70
      %p72 = scmp.ne.s32.totalorder %s60, %s61
      %p73 = scmp.eq.s32.totalorder %s23, 3
      %p74 = por %p72, %p73
      %p76 = scmp.ne.s32.totalorder %s61, %s75
      %p77 = scmp.eq.s32.totalorder %s23, 0
      %p78 = por %p76, %p77
      %s79 = ssub.s32 %s25, %s32
      %p80 = scmp.eq.s32.totalorder %s79, 0
      %s82 = sadd.s32 %s81, 1
      %s83 = scalar_select %p80, %s81, %s82
      %p86 = pneg %p80
      %p87 = scmp.eq.s32.totalorder %s17, 3
      %p88 = por %p86, %p87
      %p89 = scmp.ne.s32.totalorder %s81, %s84
      %p90 = scmp.eq.s32.totalorder %s17, 0
      %p91 = por %p89, %p90
      %p92 = scmp.ne.s32.totalorder %s81, %s84
      %p93 = scmp.eq.s32.totalorder %s22, 3
      %p94 = por %p92, %p93
      %p95 = scmp.ne.s32.totalorder %s84, %s85
      %p96 = scmp.eq.s32.totalorder %s22, 0
      %p97 = por %p95, %p96
      %p98 = scmp.ne.s32.totalorder %s84, %s85
      %p99 = scmp.eq.s32.totalorder %s23, 3
      %p100 = por %p98, %p99
      %p102 = scmp.ne.s32.totalorder %s85, %s101
      %p103 = scmp.eq.s32.totalorder %s23, 0
      %p104 = por %p102, %p103
      %s105 = sadd.s32 %s24, 1
      %p106 = scmp.lt.s32.totalorder %s105, 3
      %s107 = scalar_select %p106, %s105, 3
      %s108 = sadd.s32 %s36, 1
      %p109 = scmp.lt.s32.totalorder %s108, 3
      %s110 = scalar_select %p109, %s108, 3
      %s111 = ssub.s32 %s107, %s110
      %p112 = scmp.eq.s32.totalorder %s111, 0
      %s114 = sadd.s32 %s113, 1
      %s115 = scalar_select %p112, %s113, %s114
      %p118 = pneg %p112
      %p119 = scmp.eq.s32.totalorder %s17, 3
      %p120 = por %p118, %p119
      %p121 = scmp.ne.s32.totalorder %s113, %s116
      %p122 = scmp.eq.s32.totalorder %s17, 0
      %p123 = por %p121, %p122
      %p124 = scmp.ne.s32.totalorder %s113, %s116
      %p125 = scmp.eq.s32.totalorder %s22, 3
      %p126 = por %p124, %p125
      %p127 = scmp.ne.s32.totalorder %s116, %s117
      %p128 = scmp.eq.s32.totalorder %s22, 0
      %p129 = por %p127, %p128
      %p130 = scmp.ne.s32.totalorder %s116, %s117
      %p131 = scmp.eq.s32.totalorder %s23, 3
      %p132 = por %p130, %p131
      %p134 = scmp.ne.s32.totalorder %s117, %s133
      %p135 = scmp.eq.s32.totalorder %s23, 0
      %p136 = por %p134, %p135
      %s137 = ssub.s32 %s24, %s36
      %p138 = scmp.eq.s32.totalorder %s137, 0
      %s140 = sadd.s32 %s139, 1
      %s141 = scalar_select %p138, %s139, %s140
      %p144 = pneg %p138
      %p145 = scmp.eq.s32.totalorder %s17, 3
      %p146 = por %p144, %p145
      %p147 = scmp.ne.s32.totalorder %s139, %s142
      %p148 = scmp.eq.s32.totalorder %s17, 0
      %p149 = por %p147, %p148
      %p150 = scmp.ne.s32.totalorder %s139, %s142
      %p151 = scmp.eq.s32.totalorder %s22, 3
      %p152 = por %p150, %p151
      %p153 = scmp.ne.s32.totalorder %s142, %s143
      %p154 = scmp.eq.s32.totalorder %s22, 0
      %p155 = por %p153, %p154
      %p156 = scmp.ne.s32.totalorder %s142, %s143
      %p157 = scmp.eq.s32.totalorder %s23, 3
      %p158 = por %p156, %p157
      %p160 = scmp.ne.s32.totalorder %s143, %s159
      %p161 = scmp.eq.s32.totalorder %s23, 0
      %p162 = por %p160, %p161
      %s163 = ssub.s32 %s24, %s36
      %s164 = ssub.s32 %s25, %s32
      %s165 = sor.u32 %s163, %s164
      %p166 = scmp.eq.s32.totalorder %s165, 0
      %s168 = sadd.s32 %s167, 1
      %s169 = scalar_select %p166, %s167, %s168
      %p172 = pneg %p166
      %p173 = scmp.eq.s32.totalorder %s17, 3
      %p174 = por %p172, %p173
      %p175 = scmp.ne.s32.totalorder %s167, %s170
      %p176 = scmp.eq.s32.totalorder %s17, 0
      %p177 = por %p175, %p176
      %p178 = scmp.ne.s32.totalorder %s167, %s170
      %p179 = scmp.eq.s32.totalorder %s22, 3
      %p180 = por %p178, %p179
      %p181 = scmp.ne.s32.totalorder %s170, %s171
      %p182 = scmp.eq.s32.totalorder %s22, 0
      %p183 = por %p181, %p182
      %p184 = scmp.ne.s32.totalorder %s170, %s171
      %p185 = scmp.eq.s32.totalorder %s23, 3
      %p186 = por %p184, %p185
      %p188 = scmp.ne.s32.totalorder %s171, %s187
      %p189 = scmp.eq.s32.totalorder %s23, 0
      %p190 = por %p188, %p189
      %p191 = scmp.le.s32.totalorder 1, %s17
      %p192 = scmp.lt.s32.totalorder %s17, 5
      %p193 = pnand %p191, %p192
      %p194 = pneg %p193
      // Predicated region
      $region9: #{tpu_custom_call.1} parent=5 // pred_check
        _
      $region10: #{tpu_custom_call.1} parent=5 // pred_check_branch
        %196 = sbr.rel (%p193) target = $region12
      $region11: #{tpu_custom_call.1} parent=5 // pred_region
        %s197 = ssub.s32 %s17, 1
        // Predicated region
        $region13: #{tpu_custom_call.1} parent=11 // pred_check
          %p198 = pneg %p50
        $region14: #{tpu_custom_call.1} parent=11 // pred_check_branch
          %200 = sbr.rel (%p198) target = $region16
        $region15: #{tpu_custom_call.1} parent=11 // pred_region
          %s202 = ssub.s32 16, 16
          %203 = vsyncadd [#allocation6], %s202
          %206 = dma.hbm_to_smem %s0, 16, [#allocation3], [#allocation6]
        $region16: #{tpu_custom_call.1} parent=11 // pred_fallthru
          _
        // Predicated region
        $region17: #{tpu_custom_call.1} parent=11 // pred_check
          %p207 = pneg %p71
        $region18: #{tpu_custom_call.1} parent=11 // pred_check_branch
          %209 = sbr.rel (%p207) target = $region20
        $region19: #{tpu_custom_call.1} parent=11 // pred_region
          %s211 = ssub.s32 256, 256
          %212 = vsyncadd [#allocation4], %s211
          %s213 = sshll.u32 [#allocation7], 4
          %s214 = int_to_ptr.vmem [resolvable:$true] %s213
          %219 = dma.hbm_to_vmem [thread:$0]  %s1, 256, %s214, [#allocation4], 128, 128, 8
        $region20: #{tpu_custom_call.1} parent=11 // pred_fallthru
          _
        // Predicated region
        $region21: #{tpu_custom_call.1} parent=11 // pred_check
          %p220 = pneg %p97
        $region22: #{tpu_custom_call.1} parent=11 // pred_check_branch
          %222 = sbr.rel (%p220) target = $region24
        $region23: #{tpu_custom_call.1} parent=11 // pred_region
          %s223 = smul.u32 2, %s27
          %s225 = ssub.s32 128, 128
          %226 = vsyncadd [#allocation9], %s225
          %s227 = smul.addr %s223, 64
          %s228 = scalar_lea.hbm %s2, %s227
          %s229 = sshll.u32 [#allocation8], 4
          %s230 = int_to_ptr.vmem [resolvable:$true] %s229
          %235 = dma.hbm_to_vmem [thread:$0]  %s228, 128, %s230, [#allocation9], 64, 64, 4
        $region24: #{tpu_custom_call.1} parent=11 // pred_fallthru
          _
      $region12: #{tpu_custom_call.1} parent=5 // pred_fallthru
        _
      %p236 = scmp.lt.s32.totalorder %s17, 4
      // Predicated region
      $region25: #{tpu_custom_call.1} parent=5 // pred_check
        %p237 = pneg %p236
      $region26: #{tpu_custom_call.1} parent=5 // pred_check_branch
        %239 = sbr.rel (%p237) target = $region28
      $region27: #{tpu_custom_call.1} parent=5 // pred_region
        // Predicated region
        $region29: #{tpu_custom_call.1} parent=27 // pred_check
          %p240 = pneg %p123
        $region30: #{tpu_custom_call.1} parent=27 // pred_check_branch
          %242 = sbr.rel (%p240) target = $region32
        $region31: #{tpu_custom_call.1} parent=27 // pred_region
          %s243 = sand.u32 %s17, 1
          %s244 = scalar_lea.sflag [#allocation4], %s243
          %s245 = sand.u32 %s113, 1
          %s246 = smul.addr %s245, 64
          %s247 = scalar_lea.vmem [#allocation10], %s246
          %s248 = sadd.s32 %s24, 1
          %p249 = scmp.lt.s32.totalorder %s248, 3
          %s250 = scalar_select %p249, %s248, 3
          %s252 = ssub.s32 1024, 1024
          %253 = vsyncadd %s244, %s252
          %s254 = smul.addr %s250, 16
          %s255 = smul.addr %s254, 64
          %s256 = scalar_lea.hbm %s3, %s255
          %s257 = sshll.u32 %s247, 4
          %s258 = int_to_ptr.vmem [resolvable:$true] %s257
          %263 = dma.hbm_to_vmem [thread:$0]  %s256, 1024, %s258, %s244, 64, 64, 4
        $region32: #{tpu_custom_call.1} parent=27 // pred_fallthru
          _
        // Predicated region
        $region33: #{tpu_custom_call.1} parent=27 // pred_check
          %p264 = pneg %p149
        $region34: #{tpu_custom_call.1} parent=27 // pred_check_branch
          %266 = sbr.rel (%p264) target = $region36
        $region35: #{tpu_custom_call.1} parent=27 // pred_region
          %p267 = scmp.lt.s32.totalorder %s24, 3
          %s268 = scalar_select %p267, %s24, 3
          %s269 = smul.addr %s268, 2
          %s270 = scalar_lea.vmem %s4, %s269
        $region36: #{tpu_custom_call.1} parent=27 // pred_fallthru
          _
      $region28: #{tpu_custom_call.1} parent=5 // pred_fallthru
        _
      %p271 = scmp.le.s32.totalorder 1, %s17
      %p272 = scmp.lt.s32.totalorder %s17, 5
      %p273 = pnand %p271, %p272
      %p274 = pneg %p273
      // Predicated region
      $region37: #{tpu_custom_call.1} parent=5 // pred_check
        _
      $region38: #{tpu_custom_call.1} parent=5 // pred_check_branch
        %276 = sbr.rel (%p273) target = $region40
      $region39: #{tpu_custom_call.1} parent=5 // pred_region
        %s277 = ssub.s32 %s17, 1
        // Predicated region
        $region41: #{tpu_custom_call.1} parent=39 // pred_check
          %p278 = pneg %p50
        $region42: #{tpu_custom_call.1} parent=39 // pred_check_branch
          %280 = sbr.rel (%p278) target = $region44
        $region43: #{tpu_custom_call.1} parent=39 // pred_region
          %281 = dma.done [#allocation6], 16
        $region44: #{tpu_custom_call.1} parent=39 // pred_fallthru
          _
        // Predicated region
        $region45: #{tpu_custom_call.1} parent=39 // pred_check
          %p282 = pneg %p71
        $region46: #{tpu_custom_call.1} parent=39 // pred_check_branch
          %284 = sbr.rel (%p282) target = $region48
        $region47: #{tpu_custom_call.1} parent=39 // pred_region
          %285 = dma.done [#allocation4], 256
        $region48: #{tpu_custom_call.1} parent=39 // pred_fallthru
          _
        // Predicated region
        $region49: #{tpu_custom_call.1} parent=39 // pred_check
          %p286 = pneg %p97
        $region50: #{tpu_custom_call.1} parent=39 // pred_check_branch
          %288 = sbr.rel (%p286) target = $region52
        $region51: #{tpu_custom_call.1} parent=39 // pred_region
          %289 = dma.done [#allocation9], 128
        $region52: #{tpu_custom_call.1} parent=39 // pred_fallthru
          _
        %s290 = sand.u32 %s22, 1
        %s291 = scalar_lea.sflag [#allocation4], %s290
        %s292 = sand.u32 %s116, 1
        %s293 = smul.addr %s292, 64
        %s294 = scalar_lea.vmem [#allocation10], %s293
        // Predicated region
        $region53: #{tpu_custom_call.1} parent=39 // pred_check
          %p295 = pneg %p129
        $region54: #{tpu_custom_call.1} parent=39 // pred_check_branch
          %297 = sbr.rel (%p295) target = $region56
        $region55: #{tpu_custom_call.1} parent=39 // pred_region
          %298 = dma.done %s291, 1024
        $region56: #{tpu_custom_call.1} parent=39 // pred_fallthru
          _
        %299 = sfence
        %p300 = pneg %p50
        %p301 = pneg %p47
        %p302 = pneg %p71
        %p303 = pneg %p68
        %p304 = pneg %p97
        %p305 = pneg %p94
        %s306 = sand.u32 %s22, 1
        %s307 = scalar_lea.sflag [#allocation4], %s306
        %s308 = sand.u32 %s116, 1
        %s309 = smul.addr %s308, 64
        %s310 = scalar_lea.vmem [#allocation10], %s309
        %p311 = pneg %p129
        %p312 = pneg %p126
        %p313 = scmp.lt.s32.totalorder %s26, 3
        %s314 = scalar_select %p313, %s26, 3
        %s315 = smul.addr %s314, 2
        %s316 = scalar_lea.vmem %s4, %s315
        %p317 = pneg %p155
        %p318 = pneg %p152
        %p319 = pneg %p183
        %p320 = pneg %p180
        %s321 = sand.u32 %s170, 1
        %s322 = scalar_lea.sflag [#allocation5], %s321
        %s323 = sand.u32 %s170, 1
        %s324 = smul.addr %s323, 32
        %s325 = scalar_lea.vmem [#allocation11], %s324
        %s326 = smul.u32 2, %s27
        %s327 = sadd.s32 %s26, 1
        %p328 = scmp.lt.s32.totalorder %s327, 3
        %s329 = scalar_select %p328, %s327, 3
        %p330 = scmp.lt.s32.totalorder %s26, 3
        %s331 = scalar_select %p330, %s26, 3
        %s332 = smul.addr %s331, 2
        %s333 = scalar_lea.vmem %s4, %s332
        %s334 = smul.u32 2, %s27
        %s336 = smul.u32 %s27, 16
        %p337 = scmp.eq.s32.totalorder %s26, 0
        %p338 = scmp.eq.s32.totalorder %s27, 0
        %p339 = pnand %p337, %p338
        %p340 = pneg %p339
        // Predicated region
        $region57: #{tpu_custom_call.1} parent=39 // pred_check
          _
        $region58: #{tpu_custom_call.1} parent=39 // pred_check_branch
          %342 = sbr.rel (%p339) target = $region60
        $region59: #{tpu_custom_call.1} parent=39 // pred_region
          %v343 = vld [vmem:[#allocation7] sm:$0xff]
          %v344 = vld [vmem:[#allocation7 + $0x8] sm:$0xff]
          %v347 = vunpack.c.l.b16 %v343
          %v348 = vunpack.c.h.b16 %v343
          %v349 = vunpack.c.l.b16 %v344
          %v350 = vunpack.c.h.b16 %v344
          %v351 = vpack.c.b16 %v349, %v347
          %v352 = vpack.c.b16 %v350, %v348
          %355 = vst [vmem:[#allocation2] sm:$0xff] %v351
          %356 = vst [vmem:[#allocation2 + $0x8] sm:$0xff] %v352
        $region60: #{tpu_custom_call.1} parent=39 // pred_fallthru
          _
        %v357 = vld [vmem:[#allocation8] sm:$0xf]
        %v358 = vld [vmem:[#allocation8 + $0x4] sm:$0xf]
        %p359 = scmp.lt.s32.totalorder %s26, 0
        %s360 = ssub.s32 0, %s26
        %s361 = scalar_select %p359, %s360, %s26
        %s362 = sand.u32 %s361, 1
        %s363 = ssub.s32 0, %s362
        %s364 = scalar_select %p359, %s363, %s362
        %s365 = ssub.s32 1, %s364
        %s366 = sld [smem:[#allocation3 + %s26]]
        %v367 = vld [vmem:[%s294] sm:$0xf]
        %v368 = vld [vmem:[%s294 + $0x4] sm:$0xf]
        %v369 = vld [vmem:[%s294 + $0x8] sm:$0xf]
        %v370 = vld [vmem:[%s294 + $0xc] sm:$0xf]
        %v371 = vld [vmem:[%s294 + $0x10] sm:$0xf]
        %v372 = vld [vmem:[%s294 + $0x14] sm:$0xf]
        %v373 = vld [vmem:[%s294 + $0x18] sm:$0xf]
        %v374 = vld [vmem:[%s294 + $0x1c] sm:$0xf]
        %v375 = vld [vmem:[%s294 + $0x20] sm:$0xf]
        %v376 = vld [vmem:[%s294 + $0x24] sm:$0xf]
        %v377 = vld [vmem:[%s294 + $0x28] sm:$0xf]
        %v378 = vld [vmem:[%s294 + $0x2c] sm:$0xf]
        %v379 = vld [vmem:[%s294 + $0x30] sm:$0xf]
        %v380 = vld [vmem:[%s294 + $0x34] sm:$0xf]
        %v381 = vld [vmem:[%s294 + $0x38] sm:$0xf]
        %v382 = vld [vmem:[%s294 + $0x3c] sm:$0xf]
        %p383 = scmp.lt.s32.totalorder %s26, 2
        // Predicated region
        $region61: #{tpu_custom_call.1} parent=39 // pred_check
          %p384 = pneg %p383
        $region62: #{tpu_custom_call.1} parent=39 // pred_check_branch
          %386 = sbr.rel (%p384) target = $region64
        $region63: #{tpu_custom_call.1} parent=39 // pred_region
          %s387 = smul.u32 %s364, 2
          %s388 = smul.addr %s387, 8
          %s389 = scalar_lea.vmem [#allocation2], %s388
          %v390 = vld [vmem:[%s389] sm:$0xff]
          %v391 = vld [vmem:[%s389 + $0x8] sm:$0xff]
          %v392 = vld [vmem:[%s333] sm:$0x3]
          %v394 = vlaneseq
          %v395 = vshrl.u32 %v394, 7
          %v396 = vsub.s32 0, %v395
          %v397 = vrot.slane %v392, %v396
          %v398 = vlaneseq
          %v399 = vshrl.u32 %v398, 7
          %v400 = vsub.s32 1, %v399
          %v401 = vrot.slane %v392, %v400
          %v406 = vunpack.c.l.b16 %v357
          %v407 = vunpack.c.l.b16 %v358
          %v408 = vpack.c.b16 %v407, %v406
          %vm409 = vcmask 130048
          %v411 = vsel %vm409, %v408, 0
          %413 = vmatprep.subr.bf16.mxu0 %v391
          %414 = vmatpush1.bf16.msra.mxu0 %v390
          %415 = vmatprep.subr.bf16.mxu0 0
          %416 = vmatpush1.bf16.msra.mxu0 0
          %417 = vmatprep.subr.bf16.mxu0 0
          %418 = vmatpush1.bf16.msra.mxu0 0
          %419 = vmatprep.subr.bf16.mxu0 0
          %420 = vmatpush1.bf16.msra.mxu0 0
          %421 = vmatprep.subr.bf16.mxu0 0
          %422 = vmatpush1.bf16.msra.mxu0 0
          %423 = vmatprep.subr.bf16.mxu0 0
          %424 = vmatpush1.bf16.msra.mxu0 0
          %425 = vmatprep.subr.bf16.mxu0 0
          %426 = vmatpush1.bf16.msra.mxu0 0
          %427 = vmatprep.subr.bf16.mxu0 0
          %428 = vmatpush1.bf16.msra.mxu0 0
          %429 = vmatprep.subr.bf16.mxu0 0
          %430 = vmatpush1.bf16.msra.mxu0 0
          %431 = vmatprep.subr.bf16.mxu0 0
          %432 = vmatpush1.bf16.msra.mxu0 0
          %433 = vmatprep.subr.bf16.mxu0 0
          %434 = vmatpush1.bf16.msra.mxu0 0
          %435 = vmatprep.subr.bf16.mxu0 0
          %436 = vmatpush1.bf16.msra.mxu0 0
          %437 = vmatprep.subr.bf16.mxu0 0
          %438 = vmatpush1.bf16.msra.mxu0 0
          %439 = vmatprep.subr.bf16.mxu0 0
          %440 = vmatpush1.bf16.msra.mxu0 0
          %441 = vmatprep.subr.bf16.mxu0 0
          %442 = vmatpush1.bf16.msra.mxu0 0
          %443 = vmatprep.subr.bf16.mxu0 0
          %444 = vmatpush1.bf16.msra.mxu0 0
          %445 = vmatprep.mubr.bf16.mxu0 0
          %446 = vmatmul.mubr.bf16.gmra.mrb[0].mxu0 %v411
          %v447 = vpop.f32.mrb[0].mxu0
          %v448 = vadd.f32 %v397, %v447
          %v449 = vpop.f32.mrb[0].mxu0
          %v450 = vadd.f32 %v401, %v449
          %v451 = vpop.f32.mrb[0].mxu0
          %v452 = vadd.f32 %v397, %v451
          %v453 = vpop.f32.mrb[0].mxu0
          %v454 = vadd.f32 %v401, %v453
          %455 = vdwg.mxu0
          %vm456 = vcmp.ge.f32.partialorder %v448, 0.0
          %vm457 = vcmp.ge.f32.partialorder %v450, 0.0
          %vm458 = vcmp.ge.f32.partialorder %v452, 0.0
          %vm459 = vcmp.ge.f32.partialorder %v454, 0.0
          %v460 = vstv %s366
          %v461 = vmul.f32 %v460, %v448
          %v462 = vmul.f32 %v460, %v450
          %v463 = vmul.f32 %v460, %v452
          %v464 = vmul.f32 %v460, %v454
          %v465 = vsel %vm456, %v448, %v461
          %v466 = vsel %vm457, %v450, %v462
          %v467 = vsel %vm458, %v452, %v463
          %v468 = vsel %vm459, %v454, %v464
          %469 = vst [vmem:[%s325] sm:$0xff] %v465
          %470 = vst [vmem:[%s325 + $0x8] sm:$0xff] %v466
          %471 = vst [vmem:[%s325 + $0x10] sm:$0xff] %v467
          %472 = vst [vmem:[%s325 + $0x18] sm:$0xff] %v468
          %v473 = vpack.c.bf16 %v467, %v465
          %v474 = vpack.c.bf16 %v468, %v466
          %v491 = vunpack.c.l.b16 %v367
          %v492 = vunpack.c.l.b16 %v368
          %v493 = vunpack.c.l.b16 %v369
          %v494 = vunpack.c.l.b16 %v370
          %v495 = vunpack.c.l.b16 %v371
          %v496 = vunpack.c.l.b16 %v372
          %v497 = vunpack.c.l.b16 %v373
          %v498 = vunpack.c.l.b16 %v374
          %v499 = vunpack.c.l.b16 %v375
          %v500 = vunpack.c.l.b16 %v376
          %v501 = vunpack.c.l.b16 %v377
          %v502 = vunpack.c.l.b16 %v378
          %v503 = vunpack.c.l.b16 %v379
          %v504 = vunpack.c.l.b16 %v380
          %v505 = vunpack.c.l.b16 %v381
          %v506 = vunpack.c.l.b16 %v382
          %v507 = vpack.c.b16 %v492, %v491
          %v508 = vpack.c.b16 %v494, %v493
          %v509 = vpack.c.b16 %v496, %v495
          %v510 = vpack.c.b16 %v498, %v497
          %v511 = vpack.c.b16 %v500, %v499
          %v512 = vpack.c.b16 %v502, %v501
          %v513 = vpack.c.b16 %v504, %v503
          %v514 = vpack.c.b16 %v506, %v505
          %523 = vmatprep.subr.bf16.mxu0 0
          %524 = vmatpush1.bf16.msra.mxu0 %v507
          %525 = vmatprep.subr.bf16.mxu0 0
          %526 = vmatpush1.bf16.msra.mxu0 %v508
          %527 = vmatprep.subr.bf16.mxu0 0
          %528 = vmatpush1.bf16.msra.mxu0 %v509
          %529 = vmatprep.subr.bf16.mxu0 0
          %530 = vmatpush1.bf16.msra.mxu0 %v510
          %531 = vmatprep.subr.bf16.mxu0 0
          %532 = vmatpush1.bf16.msra.mxu0 %v511
          %533 = vmatprep.subr.bf16.mxu0 0
          %534 = vmatpush1.bf16.msra.mxu0 %v512
          %535 = vmatprep.subr.bf16.mxu0 0
          %536 = vmatpush1.bf16.msra.mxu0 %v513
          %537 = vmatprep.subr.bf16.mxu0 0
          %538 = vmatpush1.bf16.msra.mxu0 %v514
          %539 = vmatprep.subr.bf16.mxu0 0
          %540 = vmatpush1.bf16.msra.mxu0 0
          %541 = vmatprep.subr.bf16.mxu0 0
          %542 = vmatpush1.bf16.msra.mxu0 0
          %543 = vmatprep.subr.bf16.mxu0 0
          %544 = vmatpush1.bf16.msra.mxu0 0
          %545 = vmatprep.subr.bf16.mxu0 0
          %546 = vmatpush1.bf16.msra.mxu0 0
          %547 = vmatprep.subr.bf16.mxu0 0
          %548 = vmatpush1.bf16.msra.mxu0 0
          %549 = vmatprep.subr.bf16.mxu0 0
          %550 = vmatpush1.bf16.msra.mxu0 0
          %551 = vmatprep.subr.bf16.mxu0 0
          %552 = vmatpush1.bf16.msra.mxu0 0
          %553 = vmatprep.subr.bf16.mxu0 0
          %554 = vmatpush1.bf16.msra.mxu0 0
          %555 = vmatprep.mubr.bf16.mxu0 0
          %556 = vmatmul.mubr.bf16.gmra.mrb[0].mxu0 %v473
          %v557 = vpop.f32.mrb[0].mxu0
          %v558 = vadd.f32 0.0, %v557
          %v559 = vpop.f32.mrb[0].mxu0
          %v560 = vpop.f32.mrb[0].mxu0
          %v561 = vadd.f32 0.0, %v560
          %v562 = vpop.f32.mrb[0].mxu0
          %563 = vdwg.mxu0
          %v564 = vpack.c.bf16 %v561, %v558
          %565 = vmatprep.subr.bf16.mxu0 0
          %566 = vmatpush1.bf16.msra.mxu0 %v507
          %567 = vmatprep.subr.bf16.mxu0 0
          %568 = vmatpush1.bf16.msra.mxu0 %v508
          %569 = vmatprep.subr.bf16.mxu0 0
          %570 = vmatpush1.bf16.msra.mxu0 %v509
          %571 = vmatprep.subr.bf16.mxu0 0
          %572 = vmatpush1.bf16.msra.mxu0 %v510
          %573 = vmatprep.subr.bf16.mxu0 0
          %574 = vmatpush1.bf16.msra.mxu0 %v511
          %575 = vmatprep.subr.bf16.mxu0 0
          %576 = vmatpush1.bf16.msra.mxu0 %v512
          %577 = vmatprep.subr.bf16.mxu0 0
          %578 = vmatpush1.bf16.msra.mxu0 %v513
          %579 = vmatprep.subr.bf16.mxu0 0
          %580 = vmatpush1.bf16.msra.mxu0 %v514
          %581 = vmatprep.subr.bf16.mxu0 0
          %582 = vmatpush1.bf16.msra.mxu0 0
          %583 = vmatprep.subr.bf16.mxu0 0
          %584 = vmatpush1.bf16.msra.mxu0 0
          %585 = vmatprep.subr.bf16.mxu0 0
          %586 = vmatpush1.bf16.msra.mxu0 0
          %587 = vmatprep.subr.bf16.mxu0 0
          %588 = vmatpush1.bf16.msra.mxu0 0
          %589 = vmatprep.subr.bf16.mxu0 0
          %590 = vmatpush1.bf16.msra.mxu0 0
          %591 = vmatprep.subr.bf16.mxu0 0
          %592 = vmatpush1.bf16.msra.mxu0 0
          %593 = vmatprep.subr.bf16.mxu0 0
          %594 = vmatpush1.bf16.msra.mxu0 0
          %595 = vmatprep.subr.bf16.mxu0 0
          %596 = vmatpush1.bf16.msra.mxu0 0
          %597 = vmatprep.mubr.bf16.mxu0 0
          %598 = vmatmul.mubr.bf16.gmra.mrb[0].mxu0 %v474
          %v599 = vpop.f32.mrb[0].mxu0
          %v600 = vadd.f32 0.0, %v599
          %v601 = vpop.f32.mrb[0].mxu0
          %v602 = vpop.f32.mrb[0].mxu0
          %v603 = vadd.f32 0.0, %v602
          %v604 = vpop.f32.mrb[0].mxu0
          %605 = vdwg.mxu0
          %v606 = vpack.c.bf16 %v603, %v600
          %p607 = scmp.eq.s32.totalorder %s365, 0
          // Predicated region
          $region65: #{tpu_custom_call.1} parent=63 // pred_check
            %p608 = pneg %p607
          $region66: #{tpu_custom_call.1} parent=63 // pred_check_branch
            %610 = sbr.rel (%p608) target = $region68
          $region67: #{tpu_custom_call.1} parent=63 // pred_region
            %s611 = sshra.s32 %s336, 4
            %s612 = sand.u32 %s336, 15
            %s613 = smul.u32 %s611, 2
            %s614 = smul.addr %s613, 8
            %s615 = scalar_lea.vmem [#allocation2], %s614
            %616 = vst [vmem:[%s615] sm:$0xff] %v564
            %617 = vst [vmem:[%s615 + $0x8] sm:$0xff] %v606
          $region68: #{tpu_custom_call.1} parent=63 // pred_fallthru
            _
          %p618 = scmp.eq.s32.totalorder %s365, 1
          // Predicated region
          $region69: #{tpu_custom_call.1} parent=63 // pred_check
            %p619 = pneg %p618
          $region70: #{tpu_custom_call.1} parent=63 // pred_check_branch
            %621 = sbr.rel (%p619) target = $region72
          $region71: #{tpu_custom_call.1} parent=63 // pred_region
            %s622 = sshra.s32 %s336, 4
            %s623 = sand.u32 %s336, 15
            %s624 = smul.u32 %s622, 2
            %s625 = sadd.s32 %s624, 2
            %s626 = smul.addr %s625, 8
            %s627 = scalar_lea.vmem [#allocation2], %s626
            %628 = vst [vmem:[%s627] sm:$0xff] %v564
            %629 = vst [vmem:[%s627 + $0x8] sm:$0xff] %v606
          $region72: #{tpu_custom_call.1} parent=63 // pred_fallthru
            _
        $region64: #{tpu_custom_call.1} parent=39 // pred_fallthru
          _
        %p630 = scmp.ge.s32.totalorder %s26, 2
        // Predicated region
        $region73: #{tpu_custom_call.1} parent=39 // pred_check
          %p631 = pneg %p630
        $region74: #{tpu_custom_call.1} parent=39 // pred_check_branch
          %633 = sbr.rel (%p631) target = $region76
        $region75: #{tpu_custom_call.1} parent=39 // pred_region
          %s634 = smul.u32 %s364, 2
          %s635 = smul.addr %s634, 8
          %s636 = scalar_lea.vmem [#allocation2], %s635
          %v637 = vld [vmem:[%s636] sm:$0xff]
          %v638 = vld [vmem:[%s333] sm:$0x1]
          %v640 = vlaneseq
          %v641 = vshrl.u32 %v640, 7
          %v642 = vsub.s32 0, %v641
          %v643 = vrot.slane %v638, %v642
          %v647 = vunpack.c.l.b16 %v357
          %v648 = vunpack.c.l.b16 %v358
          %v649 = vpack.c.b16 %v648, %v647
          %vm650 = vcmask 130048
          %v652 = vsel %vm650, %v649, 0
          %654 = vmatprep.subr.bf16.mxu0 0
          %655 = vmatpush1.bf16.msra.mxu0 %v637
          %656 = vmatprep.subr.bf16.mxu0 0
          %657 = vmatpush1.bf16.msra.mxu0 0
          %658 = vmatprep.subr.bf16.mxu0 0
          %659 = vmatpush1.bf16.msra.mxu0 0
          %660 = vmatprep.subr.bf16.mxu0 0
          %661 = vmatpush1.bf16.msra.mxu0 0
          %662 = vmatprep.subr.bf16.mxu0 0
          %663 = vmatpush1.bf16.msra.mxu0 0
          %664 = vmatprep.subr.bf16.mxu0 0
          %665 = vmatpush1.bf16.msra.mxu0 0
          %666 = vmatprep.subr.bf16.mxu0 0
          %667 = vmatpush1.bf16.msra.mxu0 0
          %668 = vmatprep.subr.bf16.mxu0 0
          %669 = vmatpush1.bf16.msra.mxu0 0
          %670 = vmatprep.subr.bf16.mxu0 0
          %671 = vmatpush1.bf16.msra.mxu0 0
          %672 = vmatprep.subr.bf16.mxu0 0
          %673 = vmatpush1.bf16.msra.mxu0 0
          %674 = vmatprep.subr.bf16.mxu0 0
          %675 = vmatpush1.bf16.msra.mxu0 0
          %676 = vmatprep.subr.bf16.mxu0 0
          %677 = vmatpush1.bf16.msra.mxu0 0
          %678 = vmatprep.subr.bf16.mxu0 0
          %679 = vmatpush1.bf16.msra.mxu0 0
          %680 = vmatprep.subr.bf16.mxu0 0
          %681 = vmatpush1.bf16.msra.mxu0 0
          %682 = vmatprep.subr.bf16.mxu0 0
          %683 = vmatpush1.bf16.msra.mxu0 0
          %684 = vmatprep.subr.bf16.mxu0 0
          %685 = vmatpush1.bf16.msra.mxu0 0
          %686 = vmatprep.mubr.bf16.mxu0 0
          %687 = vmatmul.mubr.bf16.gmra.mrb[0].mxu0 %v652
          %v688 = vpop.f32.mrb[0].mxu0
          %v689 = vadd.f32 %v643, %v688
          %v690 = vpop.f32.mrb[0].mxu0
          %v691 = vpop.f32.mrb[0].mxu0
          %v692 = vadd.f32 %v643, %v691
          %v693 = vpop.f32.mrb[0].mxu0
          %694 = vdwg.mxu0
          %vm695 = vcmp.ge.f32.partialorder %v689, 0.0
          %vm696 = vcmp.ge.f32.partialorder %v692, 0.0
          %v697 = vstv %s366
          %v698 = vmul.f32 %v697, %v689
          %v699 = vmul.f32 %v697, %v692
          %v700 = vsel %vm695, %v689, %v698
          %v701 = vsel %vm696, %v692, %v699
          %702 = vst [vmem:[%s325] sm:$0xff] %v700
          %703 = vst [vmem:[%s325 + $0x10] sm:$0xff] %v701
          %704 = vst [vmem:[%s325 + $0x8] sm:$0xff] 0.0
          %705 = vst [vmem:[%s325 + $0x18] sm:$0xff] 0.0
          %p706 = scmp.lt.s32.totalorder %s26, 3
          // Predicated region
          $region77: #{tpu_custom_call.1} parent=75 // pred_check
            %p707 = pneg %p706
          $region78: #{tpu_custom_call.1} parent=75 // pred_check_branch
            %709 = sbr.rel (%p707) target = $region80
          $region79: #{tpu_custom_call.1} parent=75 // pred_region
            %v710 = vpack.c.bf16 %v701, %v700
            %v727 = vunpack.c.l.b16 %v367
            %v728 = vunpack.c.l.b16 %v368
            %v729 = vunpack.c.l.b16 %v369
            %v730 = vunpack.c.l.b16 %v370
            %v731 = vunpack.c.l.b16 %v371
            %v732 = vunpack.c.l.b16 %v372
            %v733 = vunpack.c.l.b16 %v373
            %v734 = vunpack.c.l.b16 %v374
            %v735 = vunpack.c.l.b16 %v375
            %v736 = vunpack.c.l.b16 %v376
            %v737 = vunpack.c.l.b16 %v377
            %v738 = vunpack.c.l.b16 %v378
            %v739 = vunpack.c.l.b16 %v379
            %v740 = vunpack.c.l.b16 %v380
            %v741 = vunpack.c.l.b16 %v381
            %v742 = vunpack.c.l.b16 %v382
            %v743 = vpack.c.b16 %v728, %v727
            %v744 = vpack.c.b16 %v730, %v729
            %v745 = vpack.c.b16 %v732, %v731
            %v746 = vpack.c.b16 %v734, %v733
            %v747 = vpack.c.b16 %v736, %v735
            %v748 = vpack.c.b16 %v738, %v737
            %v749 = vpack.c.b16 %v740, %v739
            %v750 = vpack.c.b16 %v742, %v741
            %759 = vmatprep.subr.bf16.mxu0 0
            %760 = vmatpush1.bf16.msra.mxu0 %v743
            %761 = vmatprep.subr.bf16.mxu0 0
            %762 = vmatpush1.bf16.msra.mxu0 %v744
            %763 = vmatprep.subr.bf16.mxu0 0
            %764 = vmatpush1.bf16.msra.mxu0 %v745
            %765 = vmatprep.subr.bf16.mxu0 0
            %766 = vmatpush1.bf16.msra.mxu0 %v746
            %767 = vmatprep.subr.bf16.mxu0 0
            %768 = vmatpush1.bf16.msra.mxu0 %v747
            %769 = vmatprep.subr.bf16.mxu0 0
            %770 = vmatpush1.bf16.msra.mxu0 %v748
            %771 = vmatprep.subr.bf16.mxu0 0
            %772 = vmatpush1.bf16.msra.mxu0 %v749
            %773 = vmatprep.subr.bf16.mxu0 0
            %774 = vmatpush1.bf16.msra.mxu0 %v750
            %775 = vmatprep.subr.bf16.mxu0 0
            %776 = vmatpush1.bf16.msra.mxu0 0
            %777 = vmatprep.subr.bf16.mxu0 0
            %778 = vmatpush1.bf16.msra.mxu0 0
            %779 = vmatprep.subr.bf16.mxu0 0
            %780 = vmatpush1.bf16.msra.mxu0 0
            %781 = vmatprep.subr.bf16.mxu0 0
            %782 = vmatpush1.bf16.msra.mxu0 0
            %783 = vmatprep.subr.bf16.mxu0 0
            %784 = vmatpush1.bf16.msra.mxu0 0
            %785 = vmatprep.subr.bf16.mxu0 0
            %786 = vmatpush1.bf16.msra.mxu0 0
            %787 = vmatprep.subr.bf16.mxu0 0
            %788 = vmatpush1.bf16.msra.mxu0 0
            %789 = vmatprep.subr.bf16.mxu0 0
            %790 = vmatpush1.bf16.msra.mxu0 0
            %791 = vmatprep.mubr.bf16.mxu0 0
            %792 = vmatmul.mubr.bf16.gmra.mrb[0].mxu0 %v710
            %v793 = vpop.f32.mrb[0].mxu0
            %v794 = vadd.f32 0.0, %v793
            %v795 = vpop.f32.mrb[0].mxu0
            %v796 = vpop.f32.mrb[0].mxu0
            %v797 = vadd.f32 0.0, %v796
            %v798 = vpop.f32.mrb[0].mxu0
            %799 = vdwg.mxu0
            %v800 = vpack.c.bf16 %v797, %v794
            %p801 = scmp.eq.s32.totalorder %s365, 0
            // Predicated region
            $region81: #{tpu_custom_call.1} parent=79 // pred_check
              %p802 = pneg %p801
            $region82: #{tpu_custom_call.1} parent=79 // pred_check_branch
              %804 = sbr.rel (%p802) target = $region84
            $region83: #{tpu_custom_call.1} parent=79 // pred_region
              %s805 = sshra.s32 %s336, 4
              %s806 = sand.u32 %s336, 15
              %s807 = smul.u32 %s805, 2
              %s808 = smul.addr %s807, 8
              %s809 = scalar_lea.vmem [#allocation2], %s808
              %810 = vst [vmem:[%s809] sm:$0xff] %v800
            $region84: #{tpu_custom_call.1} parent=79 // pred_fallthru
              _
            %p811 = scmp.eq.s32.totalorder %s365, 1
            // Predicated region
            $region85: #{tpu_custom_call.1} parent=79 // pred_check
              %p812 = pneg %p811
            $region86: #{tpu_custom_call.1} parent=79 // pred_check_branch
              %814 = sbr.rel (%p812) target = $region88
            $region87: #{tpu_custom_call.1} parent=79 // pred_region
              %s815 = sshra.s32 %s336, 4
              %s816 = sand.u32 %s336, 15
              %s817 = smul.u32 %s815, 2
              %s818 = sadd.s32 %s817, 2
              %s819 = smul.addr %s818, 8
              %s820 = scalar_lea.vmem [#allocation2], %s819
              %821 = vst [vmem:[%s820] sm:$0xff] %v800
            $region88: #{tpu_custom_call.1} parent=79 // pred_fallthru
              _
          $region80: #{tpu_custom_call.1} parent=75 // pred_fallthru
            _
        $region76: #{tpu_custom_call.1} parent=39 // pred_fallthru
          _
        %s822 = sand.u32 %s170, 1
        %s823 = scalar_lea.sflag [#allocation5], %s822
        %s824 = sand.u32 %s170, 1
        %s825 = smul.addr %s824, 32
        %s826 = scalar_lea.vmem [#allocation11], %s825
        // Predicated region
        $region89: #{tpu_custom_call.1} parent=39 // pred_check
          %p827 = pneg %p180
        $region90: #{tpu_custom_call.1} parent=39 // pred_check_branch
          %829 = sbr.rel (%p827) target = $region92
        $region91: #{tpu_custom_call.1} parent=39 // pred_region
          %s830 = smul.u32 2, %s27
          %s832 = ssub.s32 512, 512
          %833 = vsyncadd %s823, %s832
          %s834 = smul.addr %s830, 2
          %s835 = smul.addr %s26, 4
          %s836 = sadd.s32 %s834, %s835
          %s837 = smul.addr %s836, 128
          %s838 = scalar_lea.hbm %s5, %s837
          %s839 = sshll.u32 %s826, 4
          %s840 = int_to_ptr.vmem [resolvable:$true] %s839
          %845 = dma.vmem_to_hbm [thread:$0]  %s840, 512, %s838, %s823, 256, 256, 16
        $region92: #{tpu_custom_call.1} parent=39 // pred_fallthru
          _
      $region40: #{tpu_custom_call.1} parent=5 // pred_fallthru
        _
      %p846 = scmp.le.s32.totalorder 2, %s17
      // Predicated region
      $region93: #{tpu_custom_call.1} parent=5 // pred_check
        %p847 = pneg %p846
      $region94: #{tpu_custom_call.1} parent=5 // pred_check_branch
        %849 = sbr.rel (%p847) target = $region96
      $region95: #{tpu_custom_call.1} parent=5 // pred_region
        %s850 = ssub.s32 %s17, 2
        // Predicated region
        $region97: #{tpu_custom_call.1} parent=95 // pred_check
          %p851 = pneg %p186
        $region98: #{tpu_custom_call.1} parent=95 // pred_check_branch
          %853 = sbr.rel (%p851) target = $region100
        $region99: #{tpu_custom_call.1} parent=95 // pred_region
          %s854 = sand.u32 %s171, 1
          %s855 = scalar_lea.sflag [#allocation5], %s854
          %s856 = sand.u32 %s171, 1
          %s857 = smul.addr %s856, 32
          %s858 = scalar_lea.vmem [#allocation11], %s857
          %859 = dma.done %s855, 512
        $region100: #{tpu_custom_call.1} parent=95 // pred_fallthru
          _
      $region96: #{tpu_custom_call.1} parent=5 // pred_fallthru
        _
    $region6: #{tpu_custom_call.1} parent=1 // loop_footer
      %s21 = sadd.s32 1, %s17
    $region7: #{tpu_custom_call.1} parent=1 // loop_footer_branch
      %16 = sbr.rel target = $region3
    $region8: #{tpu_custom_call.1} parent=1 // loop_exit
      _
    %860 = vsyncpa [#allocation4], 1
    %s861 = scalar_lea.sflag [#allocation4], 1
    %862 = vsyncpa %s861, 1
    %863 = vsyncpa [#allocation9], 1
    %864 = vsyncpa [#allocation5], 1
    %s865 = scalar_lea.sflag [#allocation5], 1
    %866 = vsyncpa %s865, 1
    %867 = vsyncpa [#allocation6], 1
    %s868 = scalar_lea.sflag [#allocation6], 1
    %869 = vsyncpa %s868, 1

</llo_original>
